<compile_context>
chip_gen: v6e
topology: v6e:2x2x1
jax: 0.10.0
libtpu: 0.0.40
codegen_flags: <defaults>
</compile_context>

<pallas_src>
import functools

import jax
import jax.numpy as jnp
from jax.experimental import pallas as pl
from jax.experimental.pallas import tpu as pltpu


# ---------------------------------------------------------------------------
# Phase 1: global-avg-pool (tiled HW reduction) + 1x1 conv + BN + ReLU
# ---------------------------------------------------------------------------
def _pool_conv_bn_relu_kernel(x_ref, w_ref, b_ref, y_ref, acc_ref, *,
                              hw_total, hw_tile):
    # x_ref:   [n_blk, C, hw_tile]   input tile (flattened spatial on lanes)
    # w_ref:   [C, OC]               conv weight with BN scale and 1/HW folded in
    # b_ref:   [1, OC]               folded BN bias = beta - mean * scale
    # y_ref:   [n_blk, OC]           pooled + conv + bn + relu result
    # acc_ref: [n_blk, C] f32        running channel sums (VMEM scratch)
    hw_i = pl.program_id(1)          # reduction axis is the last grid axis

    @pl.when(hw_i == 0)
    def _():
        acc_ref[...] = jnp.zeros_like(acc_ref)

    x = x_ref[...]
    if hw_total % hw_tile != 0:
        # Mask the padded tail of the last HW tile (OOB block data is garbage),
        # so the mean is taken over the true H*W only.
        start = hw_i * hw_tile
        lane = jax.lax.broadcasted_iota(jnp.int32, x.shape, 2) + start
        x = jnp.where(lane < hw_total, x, 0)

    # Accumulate partial sums in f32 regardless of input dtype.
    acc_ref[...] += jnp.sum(x.astype(jnp.float32), axis=-1)

    @pl.when(hw_i == pl.num_programs(1) - 1)
    def _():
        # 1x1 conv == channel matmul on the raw sums (1/HW and BN scale are
        # already folded into w), then bias + ReLU.
        conv = jnp.dot(acc_ref[...], w_ref[...],
                       preferred_element_type=jnp.float32)      # [n_blk, OC]
        y_ref[...] = jnp.maximum(conv + b_ref[...], 0.0).astype(y_ref.dtype)


# ---------------------------------------------------------------------------
# Phase 2: broadcast y[N, OC] over HW (== bilinear upsample of a 1x1 map)
# ---------------------------------------------------------------------------
def _broadcast_write_kernel(y_ref, o_ref):
    # y_ref: [N, oc_blk]; o_ref: [N, oc_blk, hw_tile]  (lane-dense store)
    o_ref[...] = jnp.broadcast_to(y_ref[...][:, :, None],
                                  o_ref.shape).astype(o_ref.dtype)


def _pick_hw_tile(hw, rows, itemsize, budget_bytes=4 * 1024 * 1024):
    """Largest legal lane tile (multiple of 128, or full HW) within a byte budget."""
    if rows * hw * itemsize <= budget_bytes:
        return int(hw)                            # single full tile (always legal)
    lanes = (budget_bytes // (rows * itemsize)) // 128 * 128
    return int(max(128, min(lanes, 4096)))


def image_pool_forward(x_nchw, conv_w, bn_gamma, bn_beta, bn_mean, bn_var,
                       eps=1e-5):
    """x_nchw: [N, C, H, W]. conv_w: [OC, C, 1, 1]. Returns [N, OC, H, W]."""
    N, C, H, W = x_nchw.shape
    OC = conv_w.shape[0]
    HW = H * W
    out_dtype = x_nchw.dtype
    itemsize = jnp.dtype(out_dtype).itemsize

    # --- parameter folding (tiny, done once outside the hot path) ------------
    scale = bn_gamma.astype(jnp.float32) / jnp.sqrt(
        bn_var.astype(jnp.float32) + eps)                               # [OC]
    w_folded = (conv_w.reshape(OC, C).T.astype(jnp.float32)
                * scale[None, :]) / float(HW)                           # [C, OC]
    bias = (bn_beta.astype(jnp.float32)
            - bn_mean.astype(jnp.float32) * scale).reshape(1, OC)       # [1, OC]

    x_flat = x_nchw.reshape(N, C, HW)                                   # [N, C, HW]

    # --- phase 1: tiled reduction + conv + BN + ReLU -> y[N, OC] -------------
    n_blk = 8 if (N % 8 == 0) else N          # y block second-to-last dim rule
    n_tiles = N // n_blk
    hw_tile = _pick_hw_tile(HW, rows=n_blk * C, itemsize=itemsize)
    hw_tiles = pl.cdiv(HW, hw_tile)

    y = pl.pallas_call(
        functools.partial(_pool_conv_bn_relu_kernel,
                          hw_total=HW, hw_tile=hw_tile),
        out_shape=jax.ShapeDtypeStruct((N, OC), jnp.float32),
        grid=(n_tiles, hw_tiles),
        in_specs=[
            pl.BlockSpec((n_blk, C, hw_tile), lambda n, hw: (n, 0, hw)),
            pl.BlockSpec((C, OC), lambda n, hw: (0, 0)),
            pl.BlockSpec((1, OC), lambda n, hw: (0, 0)),
        ],
        out_specs=pl.BlockSpec((n_blk, OC), lambda n, hw: (n, 0)),
        scratch_shapes=[pltpu.VMEM((n_blk, C), jnp.float32)],
        compiler_params=pltpu.CompilerParams(
            dimension_semantics=("parallel", "arbitrary"),
            vmem_limit_bytes=32 * 1024 * 1024),
    )(x_flat, w_folded, bias)

    # --- phase 2: lane-dense broadcast write -> [N, OC, HW] ------------------
    oc_blk = 128 if (OC % 128 == 0) else OC
    oc_tiles = OC // oc_blk
    hw_tile_out = _pick_hw_tile(HW, rows=N * oc_blk, itemsize=itemsize)
    hw_tiles_out = pl.cdiv(HW, hw_tile_out)

    out_flat = pl.pallas_call(
        _broadcast_write_kernel,
        out_shape=jax.ShapeDtypeStruct((N, OC, HW), out_dtype),
        grid=(oc_tiles, hw_tiles_out),
        in_specs=[pl.BlockSpec((N, oc_blk), lambda oc, hw: (0, oc))],
        out_specs=pl.BlockSpec((N, oc_blk, hw_tile_out),
                               lambda oc, hw: (0, oc, hw)),
        compiler_params=pltpu.CompilerParams(
            dimension_semantics=("parallel", "parallel"),
            vmem_limit_bytes=32 * 1024 * 1024),
    )(y)

    return out_flat.reshape(N, OC, H, W)


# ---------------------------------------------------------------------------
# Pure-JAX reference (matches the PyTorch module in inference mode)
# ---------------------------------------------------------------------------
def _reference(x_nchw, conv_w, bn_gamma, bn_beta, bn_mean, bn_var, eps=1e-5):
    pooled = jnp.mean(x_nchw, axis=(2, 3))                          # [N, C]
    conv = pooled @ conv_w.reshape(conv_w.shape[0], -1).T           # [N, OC]
    scale = bn_gamma / jnp.sqrt(bn_var + eps)
    y = jnp.maximum(conv * scale + (bn_beta - bn_mean * scale), 0.0)
    N, OC = y.shape
    H, W = x_nchw.shape[2], x_nchw.shape[3]
    return jnp.broadcast_to(y[:, :, None, None], (N, OC, H, W)).astype(x_nchw.dtype)


if __name__ == "__main__":
    key = jax.random.PRNGKey(0)
    k_x, k_w, k_g, k_b, k_m, k_v = jax.random.split(key, 6)

    N, IN_CH, OUT_CH, H, W = 2, 4, 8, 16, 16

    x = jax.random.normal(k_x, (N, IN_CH, H, W), dtype=jnp.float32)

    # Synthetic params, shapes per _ConvBnReLU(in_ch, out_ch, 1, 1, 0, 1).
    conv_w = jax.random.normal(k_w, (OUT_CH, IN_CH, 1, 1), dtype=jnp.float32) * 0.1
    bn_gamma = 1.0 + 0.05 * jax.random.normal(k_g, (OUT_CH,), dtype=jnp.float32)
    bn_beta = 0.05 * jax.random.normal(k_b, (OUT_CH,), dtype=jnp.float32)
    bn_mean = 0.05 * jax.random.normal(k_m, (OUT_CH,), dtype=jnp.float32)
    bn_var = jnp.abs(jax.random.normal(k_v, (OUT_CH,), dtype=jnp.float32)) + 0.5

    out = image_pool_forward(x, conv_w, bn_gamma, bn_beta, bn_mean, bn_var)
    out = jax.block_until_ready(out)

    ref = _reference(x, conv_w, bn_gamma, bn_beta, bn_mean, bn_var)
    assert out.shape == (N, OUT_CH, H, W)
    assert jnp.allclose(out, ref, atol=1e-5, rtol=1e-5)

    print("KERNEL_OK")
</pallas_src>

<mosaic_0001>
module attributes {stable_mosaic.version = 11 : i64} {
  func.func @_pool_conv_bn_relu_kernel(%arg0: i32, %arg1: i32, %arg2: memref<2x4x256xf32, #tpu.memory_space<vmem>>, %arg3: memref<4x8xf32, #tpu.memory_space<vmem>>, %arg4: memref<1x8xf32, #tpu.memory_space<vmem>>, %arg5: memref<2x8xf32, #tpu.memory_space<vmem>>, %arg6: memref<2x4xf32, #tpu.memory_space<vmem>>) attributes {dimension_semantics = [#tpu.dimension_semantics<parallel>, #tpu.dimension_semantics<arbitrary>], iteration_bounds = array<i64: 1, 1>, scalar_prefetch = 0 : i64, scratch_operands = 1 : i64, tpu.core_type = #tpu.core_type<tc>, window_params = [{transform_indices = @transform_0, window_bounds = array<i64: 2, 4, 256>}, {pipeline_mode = #tpu.pipeline_mode<synchronous>, transform_indices = @transform_1, window_bounds = array<i64: 4, 8>}, {pipeline_mode = #tpu.pipeline_mode<synchronous>, transform_indices = @transform_2, window_bounds = array<i64: 1, 8>}, {transform_indices = @transform_3, window_bounds = array<i64: 2, 8>}]} {
    %c0_i32 = arith.constant 0 : i32
    %0 = arith.cmpi eq, %arg1, %c0_i32 : i32
    %1 = arith.extui %0 : i1 to i32
    %c0_i32_0 = arith.constant 0 : i32
    %2 = arith.cmpi ne, %1, %c0_i32_0 : i32
    scf.if %2 {
      %cst_9 = arith.constant 0.000000e+00 : f32
      %11 = vector.broadcast %cst_9 : f32 to vector<2x4xf32>
      %c0_10 = arith.constant 0 : index
      %c0_11 = arith.constant 0 : index
      %12 = vector.load %arg6[%c0_10, %c0_11] : memref<2x4xf32, #tpu.memory_space<vmem>>, vector<2x4xf32>
      tpu.vector_store %arg6[%c0_10, %c0_11], %11 {strides = array<i32>} : memref<2x4xf32, #tpu.memory_space<vmem>>, vector<2x4xf32>,
    } else {
    }
    %c0 = arith.constant 0 : index
    %c0_1 = arith.constant 0 : index
    %c0_2 = arith.constant 0 : index
    %3 = vector.load %arg2[%c0, %c0_1, %c0_2] : memref<2x4x256xf32, #tpu.memory_space<vmem>>, vector<2x4x256xf32>
    %c0_3 = arith.constant 0 : index
    %c0_4 = arith.constant 0 : index
    %4 = vector.load %arg6[%c0_3, %c0_4] : memref<2x4xf32, #tpu.memory_space<vmem>>, vector<2x4xf32>
    %cst = arith.constant dense<0.000000e+00> : vector<2x4xf32>
    %5 = vector.multi_reduction <add>, %3, %cst [2] : vector<2x4x256xf32> to vector<2x4xf32>
    %6 = arith.addf %4, %5 : vector<2x4xf32>
    %c0_5 = arith.constant 0 : index
    %c0_6 = arith.constant 0 : index
    %7 = vector.load %arg6[%c0_5, %c0_6] : memref<2x4xf32, #tpu.memory_space<vmem>>, vector<2x4xf32>
    tpu.vector_store %arg6[%c0_5, %c0_6], %6 {strides = array<i32>} : memref<2x4xf32, #tpu.memory_space<vmem>>, vector<2x4xf32>,
    %c0_i32_7 = arith.constant 0 : i32
    %8 = arith.cmpi eq, %arg1, %c0_i32_7 : i32
    %9 = arith.extui %8 : i1 to i32
    %c0_i32_8 = arith.constant 0 : i32
    %10 = arith.cmpi ne, %9, %c0_i32_8 : i32
    scf.if %10 {
      %c0_9 = arith.constant 0 : index
      %c0_10 = arith.constant 0 : index
      %11 = vector.load %arg6[%c0_9, %c0_10] : memref<2x4xf32, #tpu.memory_space<vmem>>, vector<2x4xf32>
      %c0_11 = arith.constant 0 : index
      %c0_12 = arith.constant 0 : index
      %12 = vector.load %arg3[%c0_11, %c0_12] : memref<4x8xf32, #tpu.memory_space<vmem>>, vector<4x8xf32>
      %cst_13 = arith.constant dense<0.000000e+00> : vector<2x8xf32>
      %13 = tpu.matmul %11, %12, %cst_13 {dimension_numbers = #tpu.dot_dimension_numbers<[1], [0], [0], [1], [0, 0, 1, 1], [], []>} : vector<2x4xf32>, vector<4x8xf32>, vector<2x8xf32> -> vector<2x8xf32>
      %c0_14 = arith.constant 0 : index
      %c0_15 = arith.constant 0 : index
      %14 = vector.load %arg4[%c0_14, %c0_15] : memref<1x8xf32, #tpu.memory_space<vmem>>, vector<1x8xf32>
      %15 = vector.broadcast %14 : vector<1x8xf32> to vector<2x8xf32>
      %16 = arith.addf %13, %15 : vector<2x8xf32>
      %cst_16 = arith.constant 0.000000e+00 : f32
      %17 = vector.broadcast %cst_16 : f32 to vector<2x8xf32>
      %18 = arith.maximumf %16, %17 : vector<2x8xf32>
      %c0_17 = arith.constant 0 : index
      %c0_18 = arith.constant 0 : index
      %19 = vector.load %arg5[%c0_17, %c0_18] : memref<2x8xf32, #tpu.memory_space<vmem>>, vector<2x8xf32>
      tpu.vector_store %arg5[%c0_17, %c0_18], %18 {strides = array<i32>} : memref<2x8xf32, #tpu.memory_space<vmem>>, vector<2x8xf32>,
    } else {
    }
    return
  }
  func.func @transform_0(%arg0: i32, %arg1: i32) -> (i32, i32, i32) {
    %c0_i32 = arith.constant 0 : i32
    %c0_i32_0 = arith.constant 0 : i32
    return %arg0, %c0_i32, %arg1 : i32, i32, i32
  }
  func.func @transform_1(%arg0: i32, %arg1: i32) -> (i32, i32) {
    %c0_i32 = arith.constant 0 : i32
    %c0_i32_0 = arith.constant 0 : i32
    %c0_i32_1 = arith.constant 0 : i32
    return %c0_i32, %c0_i32_0 : i32, i32
  }
  func.func @transform_2(%arg0: i32, %arg1: i32) -> (i32, i32) {
    %c0_i32 = arith.constant 0 : i32
    %c0_i32_0 = arith.constant 0 : i32
    %c0_i32_1 = arith.constant 0 : i32
    return %c0_i32, %c0_i32_0 : i32, i32
  }
  func.func @transform_3(%arg0: i32, %arg1: i32) -> (i32, i32) {
    %c0_i32 = arith.constant 0 : i32
    %c0_i32_0 = arith.constant 0 : i32
    return %arg0, %c0_i32 : i32, i32
  }
}

</mosaic_0001>

<llo_original>
// kernel: tpu_custom_call.1
$region0: #{tpu_custom_call.1}
  #allocation0 [shape = 'u32[]', space=smem, size = 0x4, offset = 0x4, fixed_abs, tag = 'smem constant byte address 0x4 - core index']
  #allocation1 [shape = 'u32[144,128]{1,0:T(1,128)}', space=vmem, size = 0x12000, scoped, tag = 'internal scratch']
  #allocation2 [shape = 'f32[2,4]{1,0:T(2,128)}', space=vmem, size = 0x400, scoped, tag = 'scratch operand']
  %s0 = inlined_call_operand.hbm [shape: f32[2,4,256], index: 0, kind: input, shape index: {}]
  %s1 = inlined_call_operand.hbm [shape: f32[4,8], index: 1, kind: input, shape index: {}]
  %s2 = inlined_call_operand.vmem [shape: f32[1,8], index: 2, kind: input, shape index: {}]
  %s3 = inlined_call_operand.hbm [shape: f32[2,8], index: 3, kind: output, shape index: {}]
  %s4 = sld [smem:[#allocation0]]
  $region38: #{tpu_custom_call.1} parent=0
    _
  %s6 = ssub.s32 1, %s4
  %s7 = scalar_select 0, %s6, %s4
  $region1: #{tpu_custom_call.1} parent=0
    #allocation3 [shape = 'u8[8192]{0}', space=vmem, size = 0x2000, scoped, tag = 'input window, operand 0, single buffered']
    #allocation4 [shape = 's32[1]{0}', space=sflag, size = 0x4, scoped, tag = 'scoped memory for tpu_custom_call.1']
    #allocation5 [shape = 's32[1]{0}', space=sflag, size = 0x4, scoped, tag = 'scoped memory for tpu_custom_call.1']
    #allocation6 [shape = 'u8[2048]{0}', space=vmem, size = 0x800, scoped, tag = 'input window, operand 1, single buffered']
    #allocation7 [shape = 's32[1]{0}', space=sflag, size = 0x4, scoped, tag = 'scoped memory for tpu_custom_call.1']
    #allocation8 [shape = 'u8[1024]{0}', space=vmem, size = 0x400, scoped, tag = 'output window, operand 0, single buffered']
    %8 = vsyncpa [#allocation4], 0
    %9 = vsyncpa [#allocation7], 0
    %10 = vsyncpa [#allocation5], 0
    // Predicated region
    $region2: #{tpu_custom_call.1} parent=1 // pred_check
      _
    $region3: #{tpu_custom_call.1} parent=1 // pred_check_branch
      %12 = sbr.rel (0) target = $region5
    $region4: #{tpu_custom_call.1} parent=1 // pred_region
      %s14 = ssub.s32 256, 256
      %15 = vsyncadd [#allocation4], %s14
      %s16 = sshll.u32 [#allocation3], 4
      %s17 = int_to_ptr.vmem [resolvable:$true] %s16
      %22 = dma.hbm_to_vmem [thread:$0]  %s0, 256, %s17, [#allocation4], 128, 128, 8
    $region5: #{tpu_custom_call.1} parent=1 // pred_fallthru
      _
    // Predicated region
    $region6: #{tpu_custom_call.1} parent=1 // pred_check
      _
    $region7: #{tpu_custom_call.1} parent=1 // pred_check_branch
      %24 = sbr.rel (0) target = $region9
    $region8: #{tpu_custom_call.1} parent=1 // pred_region
      %s26 = ssub.s32 64, 64
      %27 = vsyncadd [#allocation7], %s26
      %s29 = sshll.u32 [#allocation6], 4
      %s30 = int_to_ptr.vmem [resolvable:$true] %s29
      %32 = dma.hbm_to_vmem [thread:$0]  %s1, 64, %s30, [#allocation7]
    $region9: #{tpu_custom_call.1} parent=1 // pred_fallthru
      _
    // Predicated region
    $region10: #{tpu_custom_call.1} parent=1 // pred_check
      _
    $region11: #{tpu_custom_call.1} parent=1 // pred_check_branch
      %34 = sbr.rel (0) target = $region13
    $region12: #{tpu_custom_call.1} parent=1 // pred_region
      _
    $region13: #{tpu_custom_call.1} parent=1 // pred_fallthru
      _
    // Predicated region
    $region14: #{tpu_custom_call.1} parent=1 // pred_check
      _
    $region15: #{tpu_custom_call.1} parent=1 // pred_check_branch
      %36 = sbr.rel (0) target = $region17
    $region16: #{tpu_custom_call.1} parent=1 // pred_region
      %37 = dma.done [#allocation4], 256
    $region17: #{tpu_custom_call.1} parent=1 // pred_fallthru
      _
    // Predicated region
    $region18: #{tpu_custom_call.1} parent=1 // pred_check
      _
    $region19: #{tpu_custom_call.1} parent=1 // pred_check_branch
      %39 = sbr.rel (0) target = $region21
    $region20: #{tpu_custom_call.1} parent=1 // pred_region
      %40 = dma.done [#allocation7], 64
    $region21: #{tpu_custom_call.1} parent=1 // pred_fallthru
      _
    %p41 = scmp.eq.s32.totalorder 0, 0
    // Predicated region
    $region22: #{tpu_custom_call.1} parent=1 // pred_check
      %p42 = pneg %p41
    $region23: #{tpu_custom_call.1} parent=1 // pred_check_branch
      %44 = sbr.rel (%p42) target = $region25
    $region24: #{tpu_custom_call.1} parent=1 // pred_region
      %vm45 = vcmask 25600
      %46 = vst.msk [vmem:[#allocation2] sm:$0x3] %vm45, 0.0
    $region25: #{tpu_custom_call.1} parent=1 // pred_fallthru
      _
    %v47 = vld [vmem:[#allocation3] sm:$0xff]
    %v48 = vld [vmem:[#allocation3 + $0x8] sm:$0xff]
    %v49 = vld [vmem:[#allocation2] sm:$0x3]
    %v52 = vcombine.high %v47, %v47
    %v53 = vcombine.high %v48, %v48
    %vm56 = vcmask 1043456
    %v57 = vsel %vm56, %v47, 0.0
    %v58 = vsel %vm56, %v52, 0.0
    %v59 = vadd.f32 %v57, %v58
    %60 = vadd.xlane.f32.xlu0 %v59
    %v61 = vpop.xlane.xlu0 %60
    %v62 = vsel %vm56, %v48, 0.0
    %v63 = vsel %vm56, %v53, 0.0
    %v64 = vadd.f32 %v62, %v63
    %65 = vadd.xlane.f32.xlu0 %v64
    %v66 = vpop.xlane.xlu0 %65
    %v69 = vlaneseq
    %v70 = vand.u32 %v69, 127
    %v71 = vlaneseq
    %v72 = vshrl.u32 %v71, 7
    %v73 = vsub.s32 %v70, %v72
    %v74 = vrot.slane %v61, %v73
    %v75 = vlaneseq
    %v76 = vshrl.u32 %v75, 7
    %v77 = vsub.s32 %v70, %v76
    %v78 = vrot.slane %v66, %v77
    %vm79 = vcmask 1041409
    %v80 = vsel %vm79, %v78, %v74
    %v82 = vadd.f32 %v49, %v80
    %vm83 = vcmask 25600
    %84 = vst.msk [vmem:[#allocation2] sm:$0x3] %vm83, %v82
    // Predicated region
    $region26: #{tpu_custom_call.1} parent=1 // pred_check
      %p85 = pneg %p41
    $region27: #{tpu_custom_call.1} parent=1 // pred_check_branch
      %87 = sbr.rel (%p85) target = $region29
    $region28: #{tpu_custom_call.1} parent=1 // pred_region
      %v88 = vld [vmem:[#allocation2] sm:$0x3]
      %v89 = vld [vmem:[#allocation6] sm:$0xf]
      %v90 = vld [vmem:[%s2] sm:$0x1]
      %v92 = vlaneseq
      %v93 = vshrl.u32 %v92, 7
      %v94 = vsub.s32 0, %v93
      %v95 = vrot.slane %v90, %v94
      %vm97 = vcmask 31744
      %v99 = vsel %vm97, %v88, 0
      %v102 = vsel %vm56, %v89, 0
      %104 = vmatprep.subr.mxu0 0.0
      %105 = vmatpush1.msra.mxu0 0.0
      %106 = vmatprep.subr.mxu0 0.0
      %107 = vmatpush1.msra.mxu0 0.0
      %108 = vmatprep.subr.mxu0 0.0
      %109 = vmatpush1.msra.mxu0 0.0
      %110 = vmatprep.subr.mxu0 0.0
      %111 = vmatpush1.msra.mxu0 0.0
      %112 = vmatprep.subr.mxu0 0.0
      %113 = vmatpush1.msra.mxu0 0.0
      %114 = vmatprep.subr.mxu0 0.0
      %115 = vmatpush1.msra.mxu0 0.0
      %116 = vmatprep.subr.mxu0 0.0
      %117 = vmatpush1.msra.mxu0 0.0
      %118 = vmatprep.subr.mxu0 0.0
      %119 = vmatpush1.msra.mxu0 0.0
      %120 = vmatprep.subr.mxu0 0.0
      %121 = vmatpush1.msra.mxu0 0.0
      %122 = vmatprep.subr.mxu0 0.0
      %123 = vmatpush1.msra.mxu0 0.0
      %124 = vmatprep.subr.mxu0 0.0
      %125 = vmatpush1.msra.mxu0 0.0
      %126 = vmatprep.subr.mxu0 0.0
      %127 = vmatpush1.msra.mxu0 0.0
      %128 = vmatprep.subr.mxu0 0.0
      %129 = vmatpush1.msra.mxu0 0.0
      %130 = vmatprep.subr.mxu0 0.0
      %131 = vmatpush1.msra.mxu0 0.0
      %132 = vmatprep.subr.mxu0 0.0
      %133 = vmatpush1.msra.mxu0 0.0
      %134 = vmatprep.subr.mxu0 0.0
      %135 = vmatpush1.msra.mxu0 %v102
      %136 = vmatprep.subr.mxu0 0.0
      %137 = vmatpush2.msra.mxu0 0.0
      %138 = vmatprep.subr.mxu0 0.0
      %139 = vmatpush2.msra.mxu0 0.0
      %140 = vmatprep.subr.mxu0 0.0
      %141 = vmatpush2.msra.mxu0 0.0
      %142 = vmatprep.subr.mxu0 0.0
      %143 = vmatpush2.msra.mxu0 0.0
      %144 = vmatprep.subr.mxu0 0.0
      %145 = vmatpush2.msra.mxu0 0.0
      %146 = vmatprep.subr.mxu0 0.0
      %147 = vmatpush2.msra.mxu0 0.0
      %148 = vmatprep.subr.mxu0 0.0
      %149 = vmatpush2.msra.mxu0 0.0
      %150 = vmatprep.subr.mxu0 0.0
      %151 = vmatpush2.msra.mxu0 0.0
      %152 = vmatprep.subr.mxu0 0.0
      %153 = vmatpush2.msra.mxu0 0.0
      %154 = vmatprep.subr.mxu0 0.0
      %155 = vmatpush2.msra.mxu0 0.0
      %156 = vmatprep.subr.mxu0 0.0
      %157 = vmatpush2.msra.mxu0 0.0
      %158 = vmatprep.subr.mxu0 0.0
      %159 = vmatpush2.msra.mxu0 0.0
      %160 = vmatprep.subr.mxu0 0.0
      %161 = vmatpush2.msra.mxu0 0.0
      %162 = vmatprep.subr.mxu0 0.0
      %163 = vmatpush2.msra.mxu0 0.0
      %164 = vmatprep.subr.mxu0 0.0
      %165 = vmatpush2.msra.mxu0 0.0
      %166 = vmatprep.subr.mxu0 0.0
      %167 = vmatpush2.msra.mxu0 0.0
      %168 = vmatprep.mubr.f32.mxu0 0.0
      %169 = vmatmul.mubr.f32.gmra.mxu0 %v99
      %v170 = vpop.f32.mrf.mxu0
      %v171 = vadd.f32 %v95, %v170
      %v172 = vpop.f32.mrf.mxu0
      %173 = vdwg.mxu0
      %v174 = vmax.f32 %v171, 0.0
      %vm175 = vcmask 58368
      %176 = vst.msk [vmem:[#allocation8] sm:$0x3] %vm175, %v174
    $region29: #{tpu_custom_call.1} parent=1 // pred_fallthru
      _
    // Predicated region
    $region30: #{tpu_custom_call.1} parent=1 // pred_check
      _
    $region31: #{tpu_custom_call.1} parent=1 // pred_check_branch
      %178 = sbr.rel (0) target = $region33
    $region32: #{tpu_custom_call.1} parent=1 // pred_region
      %s180 = ssub.s32 32, 32
      %181 = vsyncadd [#allocation5], %s180
      %s183 = sshll.u32 [#allocation8], 4
      %s184 = int_to_ptr.vmem [resolvable:$true] %s183
      %186 = dma.vmem_to_hbm [thread:$0]  %s184, 32, %s3, [#allocation5]
    $region33: #{tpu_custom_call.1} parent=1 // pred_fallthru
      _
    // Predicated region
    $region34: #{tpu_custom_call.1} parent=1 // pred_check
      _
    $region35: #{tpu_custom_call.1} parent=1 // pred_check_branch
      %188 = sbr.rel (0) target = $region37
    $region36: #{tpu_custom_call.1} parent=1 // pred_region
      %189 = dma.done [#allocation5], 32
    $region37: #{tpu_custom_call.1} parent=1 // pred_fallthru
      _
    %190 = vsyncpa [#allocation4], 1
    %191 = vsyncpa [#allocation7], 1
    %192 = vsyncpa [#allocation5], 1

</llo_original>
